<compile_context>
chip_gen: v7x
topology: tpu7x:2x2x1
jax: 0.10.0
libtpu: 0.0.40
codegen_flags: <defaults>
</compile_context>

<pallas_src>
import jax
import jax.numpy as jnp
from jax.experimental import pallas as pl
from jax.experimental.pallas import tpu as pltpu


def _round_up(a: int, b: int) -> int:
    return -(-a // b) * b


def _round_down(a: int, b: int) -> int:
    return (a // b) * b


def _reduce_identity(dtype):
    """Identity element for max in `dtype` (used for masking / padding)."""
    dtype = jnp.dtype(dtype)
    if jnp.issubdtype(dtype, jnp.floating):
        return float("-inf")
    return int(jnp.iinfo(dtype).min)


def _row_max(x):
    """Max over the lane (last) axis of a (rows, cols) tile, in its native dtype.

    When cols is a clean multiple of 128, fold the 128-wide lane chunks with
    element-wise maximums (VPU) and finish with one cross-lane (XLU) reduction.
    """
    _, cols = x.shape
    n_chunks = cols // 128
    if cols % 128 == 0 and 2 <= n_chunks <= 64:
        acc = x[:, :128]
        for c in range(1, n_chunks):
            acc = jnp.maximum(acc, x[:, c * 128:(c + 1) * 128])
        x = acc
    return jnp.max(x, axis=-1, keepdims=True)


def _single_tile_kernel(x_ref, o_ref):
    # Whole spatial extent resident in one lane tile: reduce once, store once.
    # Ragged last *row* tile needs no masking: the reduction is strictly
    # row-wise and out-of-bounds rows land in discarded output rows.
    o_ref[...] = _row_max(x_ref[...]).astype(jnp.float32)


def _make_tiled_kernel(hw: int, tk: int, dtype):
    """Kernel for the huge-HW path: HW tiled in 128-lane multiples (grid axis 1)."""
    rem = hw % tk                      # ragged lanes in the final HW tile
    ident = _reduce_identity(dtype)

    def kernel(x_ref, o_ref, acc_ref):
        k = pl.program_id(1)
        nk = pl.num_programs(1)

        @pl.when(k == 0)
        def _init():
            acc_ref[...] = jnp.full(acc_ref.shape, -jnp.inf, dtype=jnp.float32)

        x = x_ref[...]                 # native dtype; no full-tile widen

        if rem == 0:
            acc_ref[...] = jnp.maximum(acc_ref[...], _row_max(x).astype(jnp.float32))
        else:
            @pl.when(k < nk - 1)
            def _full_tile():
                acc_ref[...] = jnp.maximum(acc_ref[...],
                                           _row_max(x).astype(jnp.float32))

            @pl.when(k == nk - 1)
            def _ragged_tile():
                lane = jax.lax.broadcasted_iota(jnp.int32, x.shape, 1)
                xm = jnp.where(lane < rem, x, jnp.array(ident, dtype=x.dtype))
                acc_ref[...] = jnp.maximum(acc_ref[...],
                                           _row_max(xm).astype(jnp.float32))

        @pl.when(k == nk - 1)
        def _finalize():
            o_ref[...] = acc_ref[...]

    return kernel


def _default_block_bytes() -> int:
    """Generation-aware block budget (bigger blocks amortize per-step overhead)."""
    try:
        kind = jax.devices()[0].device_kind.lower()
    except Exception:
        return 4 * 1024 * 1024
    if "v6" in kind or "v7" in kind:
        return 8 * 1024 * 1024     # 2x8 MiB double-buffer << 32 MiB scoped default
    return 4 * 1024 * 1024         # v5e (and unknown gens): stay conservative


def spatial_pool2d(x: jax.Array, *, block_bytes: int | None = None) -> jax.Array:
    """Global max pool over spatial dims. x: [B, C, H, W] -> [B, C, 1, 1] f32."""
    B, C, H, W = x.shape
    BC, HW = B * C, H * W
    if block_bytes is None:
        block_bytes = _default_block_bytes()

    xf = x.reshape(BC, HW)             # native dtype view; no HBM-side cast or pad

    itemsize = jnp.dtype(x.dtype).itemsize
    # Sublane packing: 8 rows for 4-byte dtypes, 16 for 2-byte, 32 for 1-byte.
    row_align = max(8, 32 // itemsize)

    cost = pl.CostEstimate(flops=BC * HW, transcendentals=0,
                           bytes_accessed=BC * HW * itemsize + BC * 4)

    if HW * itemsize * row_align <= block_bytes:
        # --- Common path: whole spatial extent fits in one lane tile. ---
        tile_rows = _round_down(block_bytes // max(1, HW * itemsize), row_align)
        tile_rows = max(row_align, min(tile_rows, _round_up(BC, row_align)))
        # Keep the 128-lane fold / reduce footprint modest (vreg-resident per strip).
        tile_rows = min(tile_rows, 2048)
        # >= 2 row tiles so the 'parallel' axis can be sharded across TCs (v7x).
        if BC >= 2 * row_align:
            tile_rows = min(tile_rows, _round_up(pl.cdiv(BC, 2), row_align))

        grid = (pl.cdiv(BC, tile_rows),)
        block_in = tile_rows * HW * itemsize
        vmem_limit = min(32 << 20, max(16 << 20, 2 * block_in + (4 << 20)))

        out = pl.pallas_call(
            _single_tile_kernel,
            out_shape=jax.ShapeDtypeStruct((BC, 1), jnp.float32),
            grid_spec=pltpu.PrefetchScalarGridSpec(
                num_scalar_prefetch=0,
                grid=grid,
                in_specs=[pl.BlockSpec((tile_rows, HW), lambda i: (i, 0))],
                out_specs=pl.BlockSpec((tile_rows, 1), lambda i: (i, 0)),
            ),
            compiler_params=pltpu.CompilerParams(
                dimension_semantics=("parallel",),
                vmem_limit_bytes=vmem_limit,
            ),
            cost_estimate=cost,
        )(xf)
    else:
        # --- Huge spatial extent: tile HW in 128-lane multiples, accumulate in VMEM. ---
        tile_rows = row_align
        tk = max(128, _round_down(block_bytes // (tile_rows * itemsize), 128))
        grid = (pl.cdiv(BC, tile_rows), pl.cdiv(HW, tk))
        block_in = tile_rows * tk * itemsize
        vmem_limit = min(32 << 20, max(16 << 20, 2 * block_in + (4 << 20)))

        out = pl.pallas_call(
            _make_tiled_kernel(HW, tk, x.dtype),
            out_shape=jax.ShapeDtypeStruct((BC, 1), jnp.float32),
            grid_spec=pltpu.PrefetchScalarGridSpec(
                num_scalar_prefetch=0,
                grid=grid,
                in_specs=[pl.BlockSpec((tile_rows, tk), lambda i, k: (i, k))],
                out_specs=pl.BlockSpec((tile_rows, 1), lambda i, k: (i, 0)),
                scratch_shapes=[pltpu.VMEM((tile_rows, 1), jnp.float32)],
            ),
            compiler_params=pltpu.CompilerParams(
                dimension_semantics=("parallel", "arbitrary"),
                vmem_limit_bytes=vmem_limit,
            ),
            cost_estimate=cost,
        )(xf)

    return out.reshape(B, C, 1, 1)


if __name__ == "__main__":
    key = jax.random.PRNGKey(0)

    # Small NCHW input consistent with the module's forward (single-tile hot path).
    B, C, H, W = 2, 4, 16, 16
    x = jax.random.normal(key, (B, C, H, W), dtype=jnp.float32)
    y = jax.block_until_ready(spatial_pool2d(x))
    y_ref = jnp.max(x, axis=(2, 3), keepdims=True).astype(jnp.float32)
    assert y.shape == (B, C, 1, 1)
    assert y.dtype == jnp.float32
    assert bool(jnp.allclose(y, y_ref)), "mismatch vs reference (single-tile path)"

    # Exercise the tiled huge-HW path + ragged-lane mask + native bf16 fold by
    # forcing a tiny block budget (HW = 320 -> tk = 256, ragged remainder 64).
    x2 = jax.random.normal(jax.random.PRNGKey(1), (2, 8, 16, 20), dtype=jnp.bfloat16)
    y2 = jax.block_until_ready(spatial_pool2d(x2, block_bytes=8 * 1024))
    y2_ref = jnp.max(x2.astype(jnp.float32), axis=(2, 3), keepdims=True)
    assert y2.shape == (2, 8, 1, 1)
    assert y2.dtype == jnp.float32
    assert bool(jnp.allclose(y2, y2_ref)), "mismatch vs reference (tiled path)"

    print("KERNEL_OK")
</pallas_src>

<mosaic_0001>
module attributes {stable_mosaic.version = 11 : i64} {
  func.func @_single_tile_kernel(%arg0: i32, %arg1: memref<8x256xf32, #tpu.memory_space<vmem>>, %arg2: memref<8x1xf32, #tpu.memory_space<vmem>>) attributes {dimension_semantics = [#tpu.dimension_semantics<parallel>], iteration_bounds = array<i64: 1>, scalar_prefetch = 0 : i64, scratch_operands = 0 : i64, tpu.core_type = #tpu.core_type<tc>, window_params = [{transform_indices = @transform_0, window_bounds = array<i64: 8, 256>}, {transform_indices = @transform_1, window_bounds = array<i64: 8, 1>}]} {
    %c0 = arith.constant 0 : index
    %c0_0 = arith.constant 0 : index
    %0 = vector.load %arg1[%c0, %c0_0] : memref<8x256xf32, #tpu.memory_space<vmem>>, vector<8x256xf32>
    %1 = vector.extract_strided_slice %0 {offsets = [0, 0], sizes = [8, 128], strides = [1, 1]} : vector<8x256xf32> to vector<8x128xf32>
    %2 = vector.extract_strided_slice %0 {offsets = [0, 128], sizes = [8, 128], strides = [1, 1]} : vector<8x256xf32> to vector<8x128xf32>
    %3 = arith.maximumf %1, %2 : vector<8x128xf32>
    %cst = arith.constant dense<0xFF800000> : vector<8xf32>
    %4 = vector.multi_reduction <maximumf>, %3, %cst [1] : vector<8x128xf32> to vector<8xf32>
    %5 = vector.shape_cast %4 : vector<8xf32> to vector<8x1xf32>
    %c0_1 = arith.constant 0 : index
    %c0_2 = arith.constant 0 : index
    %6 = vector.load %arg2[%c0_1, %c0_2] : memref<8x1xf32, #tpu.memory_space<vmem>>, vector<8x1xf32>
    tpu.vector_store %arg2[%c0_1, %c0_2], %5 {strides = array<i32>} : memref<8x1xf32, #tpu.memory_space<vmem>>, vector<8x1xf32>,
    return
  }
  func.func @transform_0(%arg0: i32) -> (i32, i32) {
    %c0_i32 = arith.constant 0 : i32
    %c0_i32_0 = arith.constant 0 : i32
    return %arg0, %c0_i32 : i32, i32
  }
  func.func @transform_1(%arg0: i32) -> (i32, i32) {
    %c0_i32 = arith.constant 0 : i32
    %c0_i32_0 = arith.constant 0 : i32
    return %arg0, %c0_i32 : i32, i32
  }
}

</mosaic_0001>

<llo_original>
// kernel: tpu_custom_call.1
$region0: #{tpu_custom_call.1}
  #allocation0 [shape = 'u32[]', space=smem, size = 0x4, offset = 0x4, fixed_abs, tag = 'smem constant byte address 0x4 - core index']
  #allocation1 [shape = 'u32[144,128]{1,0:T(1,128)}', space=vmem, size = 0x12000, scoped, tag = 'internal scratch']
  %s0 = inlined_call_operand.hbm [shape: f32[8,256], index: 0, kind: input, shape index: {}]
  %s1 = inlined_call_operand.vmem [shape: f32[8,1], index: 1, kind: output, shape index: {}]
  %s2 = sld [smem:[#allocation0]]
  $region18: #{tpu_custom_call.1} parent=0
    _
  %s4 = ssub.s32 1, %s2
  %s5 = scalar_select 0, %s4, %s2
  $region1: #{tpu_custom_call.1} parent=0
    #allocation2 [shape = 'u8[8192]{0}', space=vmem, size = 0x2000, scoped, tag = 'input window, operand 0, single buffered']
    #allocation3 [shape = 's32[1]{0}', space=sflag, size = 0x4, scoped, tag = 'scoped memory for tpu_custom_call.1']
    %6 = vsyncpa [#allocation3], 0
    // Predicated region
    $region2: #{tpu_custom_call.1} parent=1 // pred_check
      _
    $region3: #{tpu_custom_call.1} parent=1 // pred_check_branch
      %8 = sbr.rel (0) target = $region5
    $region4: #{tpu_custom_call.1} parent=1 // pred_region
      %s10 = ssub.s32 256, 256
      %11 = vsyncadd [#allocation3], %s10
      %s13 = sshll.u32 [#allocation2], 4
      %s14 = int_to_ptr.vmem [resolvable:$true] %s13
      %16 = dma.hbm_to_vmem [thread:$0]  %s0, 256, %s14, [#allocation3]
    $region5: #{tpu_custom_call.1} parent=1 // pred_fallthru
      _
    // Predicated region
    $region6: #{tpu_custom_call.1} parent=1 // pred_check
      _
    $region7: #{tpu_custom_call.1} parent=1 // pred_check_branch
      %18 = sbr.rel (0) target = $region9
    $region8: #{tpu_custom_call.1} parent=1 // pred_region
      %19 = dma.done [#allocation3], 256
    $region9: #{tpu_custom_call.1} parent=1 // pred_fallthru
      _
    %v20 = vld [vmem:[#allocation2] sm:$0xff]
    %v21 = vld [vmem:[#allocation2 + $0x8] sm:$0xff]
    %v22 = vmax.f32 %v20, %v21
    %23 = vmax.xlane.f32.xlu0 %v22
    %v24 = vpop.xlane.xlu0 %23
    %vm25 = vcmask 7168
    %26 = vst.msk [vmem:[%s1] sm:$0xff] %vm25, %v24
    // Predicated region
    $region10: #{tpu_custom_call.1} parent=1 // pred_check
      _
    $region11: #{tpu_custom_call.1} parent=1 // pred_check_branch
      %28 = sbr.rel (0) target = $region13
    $region12: #{tpu_custom_call.1} parent=1 // pred_region
      _
    $region13: #{tpu_custom_call.1} parent=1 // pred_fallthru
      _
    // Predicated region
    $region14: #{tpu_custom_call.1} parent=1 // pred_check
      _
    $region15: #{tpu_custom_call.1} parent=1 // pred_check_branch
      %30 = sbr.rel (0) target = $region17
    $region16: #{tpu_custom_call.1} parent=1 // pred_region
      _
    $region17: #{tpu_custom_call.1} parent=1 // pred_fallthru
      _
    %31 = vsyncpa [#allocation3], 1

</llo_original>
